<compile_context>
chip_gen: v5e
topology: v5e:2x2
jax: 0.10.0
libtpu: 0.0.40
codegen_flags: <defaults>
</compile_context>

<pallas_src>
import functools
import math

import jax
import jax.numpy as jnp
import numpy as np
from jax import lax
from jax.experimental import pallas as pl
from jax.experimental.pallas import tpu as pltpu


# ----------------------------------------------------------------------------
# Stage 1: input projection  x @ W + b, emitted head-split as [N, H, T, d_k].
# Runs once per tensor -> the head-split transpose happens once, not per tile.
# ----------------------------------------------------------------------------
def _proj_kernel(x_ref, w_ref, b_ref, o_ref, *, heads, d_k):
    """x_ref: [1, ts, d_m] bf16; w_ref: [d_m, H*d_k] bf16; b_ref: [1, H*d_k] f32
       o_ref: [1, H, ts, d_k] bf16."""
    x = x_ref[0]
    p = jnp.dot(x, w_ref[...], preferred_element_type=jnp.float32) + b_ref[...]
    ts = x.shape[0]
    o_ref[0] = p.reshape(ts, heads, d_k).swapaxes(0, 1).astype(o_ref.dtype)


def _project(x, w, b, *, heads, d_k):
    n, t, d_m = x.shape
    ts = t
    for cand in (512, 256, 128, 64, 32, 16, 8):
        if t % cand == 0:
            ts = cand
            break
    kernel = functools.partial(_proj_kernel, heads=heads, d_k=d_k)
    return pl.pallas_call(
        kernel,
        out_shape=jax.ShapeDtypeStruct((n, heads, t, d_k), jnp.bfloat16),
        grid=(n, t // ts),
        in_specs=[
            pl.BlockSpec((1, ts, d_m), lambda bb, tt: (bb, tt, 0)),
            pl.BlockSpec(w.shape, lambda bb, tt: (0, 0)),
            pl.BlockSpec(b.shape, lambda bb, tt: (0, 0)),
        ],
        out_specs=pl.BlockSpec((1, heads, ts, d_k), lambda bb, tt: (bb, 0, tt, 0)),
        compiler_params=pltpu.CompilerParams(
            dimension_semantics=("parallel", "parallel")),
    )(x, w, b)


# ----------------------------------------------------------------------------
# Stage 2: flash-style attention core + fused output projection.
# grid = (batch, query-tile, key-tile); key-tile axis is the online-softmax
# reduction ("arbitrary"); output block / scratch are resident across it.
# ----------------------------------------------------------------------------
def _flash_kernel(q_ref, k_ref, v_ref, pad_ref, wo_ref, bo_ref, o_ref,
                  m_sc, l_sc, acc_sc, *, heads, d_k, causal, tq, tk):
    """q_ref: [1,H,tq,d_k] bf16   k_ref/v_ref: [1,H,tk,d_k] bf16
       pad_ref: [1,tk] f32 (1=keep, 0=mask)
       wo_ref: [H*d_k, d_m] bf16  bo_ref: [1,d_m] f32   o_ref: [1,tq,d_m] bf16
       scratch: m_sc/l_sc [H,tq,1] f32, acc_sc [H,tq,d_k] f32 (unnormalized)."""
    qi = pl.program_id(1)
    ki = pl.program_id(2)
    n_k = pl.num_programs(2)

    @pl.when(ki == 0)
    def _init():
        m_sc[...] = jnp.full(m_sc.shape, -jnp.inf, m_sc.dtype)
        l_sc[...] = jnp.zeros(l_sc.shape, l_sc.dtype)
        acc_sc[...] = jnp.zeros(acc_sc.shape, acc_sc.dtype)

    def _compute():
        q = q_ref[0]                                            # [H, tq, d_k]
        k = k_ref[0]                                            # [H, tk, d_k]
        v = v_ref[0]                                            # [H, tk, d_k]

        # Batched-over-heads scores; 1/sqrt(d_k) already folded into W_q.
        s = jnp.einsum('hqd,hkd->hqk', q, k,
                       preferred_element_type=jnp.float32)      # [H, tq, tk]

        # One combined additive mask (pad + causal), finite -1e30 (no NaNs).
        masked = pad_ref[...] == 0.0                            # [1, tk]
        if causal:
            row = lax.broadcasted_iota(jnp.int32, (tq, tk), 0) + qi * tq
            col = lax.broadcasted_iota(jnp.int32, (tq, tk), 1) + ki * tk
            masked = jnp.logical_or(masked, col > row)          # [tq, tk]
        bias = jnp.where(masked, jnp.float32(-1e30), jnp.float32(0.0))
        s = s + bias[None]

        # Online softmax; normalization deferred until after the PV matmul.
        m_prev = m_sc[...]
        m_new = jnp.maximum(m_prev, jnp.max(s, axis=-1, keepdims=True))
        alpha = jnp.exp(m_prev - m_new)                         # [H, tq, 1]
        e = jnp.exp(s - m_new)                                  # (0,1], bf16-safe
        l_sc[...] = alpha * l_sc[...] + jnp.sum(e, axis=-1, keepdims=True)
        acc_sc[...] = alpha * acc_sc[...] + jnp.einsum(
            'hqk,hkd->hqd', e.astype(jnp.bfloat16), v,
            preferred_element_type=jnp.float32)
        m_sc[...] = m_new

    if causal:
        # Skip key tiles entirely above the diagonal for this query tile.
        pl.when(ki * tk <= qi * tq + (tq - 1))(_compute)
    else:
        _compute()

    @pl.when(ki == n_k - 1)
    def _finalize():
        # Normalize once (EUP reciprocal), fold heads back, apply W_o.
        ctx = acc_sc[...] * pl.reciprocal(l_sc[...], approx=True)  # [H,tq,d_k]
        a = ctx.swapaxes(0, 1).reshape(tq, heads * d_k).astype(jnp.bfloat16)
        out = jnp.dot(a, wo_ref[...], preferred_element_type=jnp.float32) \
              + bo_ref[...]
        o_ref[0] = out.astype(o_ref.dtype)


# ----------------------------------------------------------------------------
# VMEM-aware tiling / limit helpers.
# ----------------------------------------------------------------------------
def _vmem_capacity_bytes():
    try:
        return int(pltpu.get_tpu_info().vmem_capacity_bytes)
    except Exception:
        return 64 * 2 ** 20        # conservative (v7x-safe) fallback


def _lane(d):
    return ((d + 127) // 128) * 128


def _vmem_need_bytes(tq, tk, heads, d_k, d_m):
    bf2, f4 = 2, 4
    dkh = heads * d_k
    # Double-buffered streamed blocks (lane-padded layouts).
    stream = 2 * (heads * tq * _lane(d_k) * bf2          # q
                  + 2 * heads * tk * _lane(d_k) * bf2    # k + v
                  + _lane(tk) * f4                       # pad mask
                  + tq * _lane(d_m) * bf2)               # output
    consts = 2 * (dkh * _lane(d_m) * bf2 + _lane(d_m) * f4)   # W_o, b_o
    scratch = heads * tq * (2 * _lane(1) + _lane(d_k)) * f4   # m, l, acc
    interm = heads * tq * (4 * _lane(tk) + 2 * _lane(d_k)) * f4
    return int(stream + consts + scratch + interm)


def _choose_tiles(t_out, t_in, heads, d_k, d_m, vmem_cap, tq, tk):
    def cands(t, opts):
        c = [o for o in opts if t % o == 0]
        return c if c else [t]
    tq_c = [tq] if tq is not None else cands(t_out, (256, 128, 64, 32, 16, 8))
    tk_c = [tk] if tk is not None else cands(t_in, (512, 256, 128, 64, 32, 16, 8))
    budget = 0.6 * vmem_cap
    for cq in tq_c:
        for ck in tk_c:
            need = _vmem_need_bytes(cq, ck, heads, d_k, d_m)
            if need <= budget:
                return cq, ck, need
    cq, ck = tq_c[-1], tk_c[-1]
    return cq, ck, _vmem_need_bytes(cq, ck, heads, d_k, d_m)


# ----------------------------------------------------------------------------
# Public wrapper (mirrors MultiHeadAttention.forward).
# ----------------------------------------------------------------------------
def multi_head_attention(q, k, v, params, *, heads, d_k, causal,
                         pad_mask=None, tq=None, tk=None):
    """q: [N, T_out, d_m], k/v: [N, T_in, d_m], pad_mask: [N, T_in] or None.
    Returns bf16 [N, T_out, d_m]."""
    n, t_out, d_m = q.shape
    t_in = k.shape[1]
    dkh = heads * d_k

    wq, bq, wk, bk, wv, bv, wo, bo = params
    scale = 1.0 / math.sqrt(d_k)

    if pad_mask is None:
        pad_mask = jnp.ones((n, t_in), jnp.float32)
    else:
        pad_mask = pad_mask.astype(jnp.float32)

    # bf16 MXU operands, f32 biases; fold 1/sqrt(d_k) into W_q / b_q.
    qb, kb, vb = (t.astype(jnp.bfloat16) for t in (q, k, v))
    wq_b = (wq * scale).astype(jnp.bfloat16)
    bq_f = (bq * scale).astype(jnp.float32).reshape(1, dkh)
    wk_b = wk.astype(jnp.bfloat16)
    bk_f = bk.astype(jnp.float32).reshape(1, dkh)
    wv_b = wv.astype(jnp.bfloat16)
    bv_f = bv.astype(jnp.float32).reshape(1, dkh)
    wo_b = wo.astype(jnp.bfloat16)
    bo_f = bo.astype(jnp.float32).reshape(1, d_m)

    # Projections computed exactly once, pre-head-split (review item 1 / 7).
    qp = _project(qb, wq_b, bq_f, heads=heads, d_k=d_k)   # [N, H, T_out, d_k]
    kp = _project(kb, wk_b, bk_f, heads=heads, d_k=d_k)   # [N, H, T_in,  d_k]
    vp = _project(vb, wv_b, bv_f, heads=heads, d_k=d_k)   # [N, H, T_in,  d_k]

    vmem_cap = _vmem_capacity_bytes()
    tq, tk, need = _choose_tiles(t_out, t_in, heads, d_k, d_m, vmem_cap, tq, tk)
    assert t_out % tq == 0 and t_in % tk == 0, "T must be divisible by tiles"
    # Never clamp below the footprint; cap derived from the actual chip.
    vmem_limit = int(min(int(0.9 * vmem_cap), max(32 * 2 ** 20, 2 * need)))

    kernel = functools.partial(_flash_kernel, heads=heads, d_k=d_k,
                               causal=causal, tq=tq, tk=tk)

    return pl.pallas_call(
        kernel,
        out_shape=jax.ShapeDtypeStruct((n, t_out, d_m), jnp.bfloat16),
        grid=(n, t_out // tq, t_in // tk),
        in_specs=[
            pl.BlockSpec((1, heads, tq, d_k), lambda b, i, j: (b, 0, i, 0)),
            pl.BlockSpec((1, heads, tk, d_k), lambda b, i, j: (b, 0, j, 0)),
            pl.BlockSpec((1, heads, tk, d_k), lambda b, i, j: (b, 0, j, 0)),
            pl.BlockSpec((1, tk), lambda b, i, j: (b, j)),
            pl.BlockSpec((dkh, d_m), lambda b, i, j: (0, 0)),   # W_o (resident)
            pl.BlockSpec((1, d_m), lambda b, i, j: (0, 0)),     # b_o (resident)
        ],
        out_specs=pl.BlockSpec((1, tq, d_m), lambda b, i, j: (b, i, 0)),
        scratch_shapes=[
            pltpu.VMEM((heads, tq, 1), jnp.float32),     # running max
            pltpu.VMEM((heads, tq, 1), jnp.float32),     # running denom
            pltpu.VMEM((heads, tq, d_k), jnp.float32),   # unnormalized context
        ],
        compiler_params=pltpu.CompilerParams(
            dimension_semantics=("parallel", "parallel", "arbitrary"),
            vmem_limit_bytes=vmem_limit),
    )(qp, kp, vp, pad_mask, wo_b, bo_f)


# ----------------------------------------------------------------------------
# Reference + demo.
# ----------------------------------------------------------------------------
def _init_linear(key, d_in, d_out):
    """Deterministic nn.Linear-style init; weight stored as [d_in, d_out]."""
    kw, kb = jax.random.split(key)
    bound = 1.0 / math.sqrt(d_in)
    w = jax.random.uniform(kw, (d_in, d_out), jnp.float32, -bound, bound)
    b = jax.random.uniform(kb, (d_out,), jnp.float32, -bound, bound)
    return w, b


def _reference(q, k, v, params, *, heads, d_k, causal, pad_mask=None):
    """Pure-JAX f32 reference mirroring the PyTorch forward exactly."""
    wq, bq, wk, bk, wv, bv, wo, bo = params
    n, t_out, _ = q.shape
    t_in = k.shape[1]
    qp = q @ wq + bq
    kp = k @ wk + bk
    vp = v @ wv + bv
    qp = qp.reshape(n, t_out, heads, d_k).transpose(0, 2, 1, 3)
    kp = kp.reshape(n, t_in, heads, d_k).transpose(0, 2, 1, 3)
    vp = vp.reshape(n, t_in, heads, d_k).transpose(0, 2, 1, 3)
    scores = (qp @ kp.transpose(0, 1, 3, 2)) / math.sqrt(d_k)
    if pad_mask is not None:
        scores = jnp.where(pad_mask[:, None, None, :] == 0, -jnp.inf, scores)
    if causal:
        cm = jnp.tril(jnp.ones((t_out, t_in)))
        scores = jnp.where(cm[None, None] == 0, -jnp.inf, scores)
    w = jax.nn.softmax(scores, axis=-1)
    a = (w @ vp).transpose(0, 2, 1, 3).reshape(n, t_out, heads * d_k)
    return a @ wo + bo


if __name__ == "__main__":
    # Small, module-consistent, lane-dense shapes (d_m = heads*d_k = 128).
    N, T, d_m, heads, d_k = 2, 16, 128, 4, 32
    causal = True

    root = jax.random.PRNGKey(0)
    kq, kk, kv, kwq, kwk, kwv, kwo = jax.random.split(root, 7)

    q = jax.random.normal(kq, (N, T, d_m), jnp.float32)
    k = jax.random.normal(kk, (N, T, d_m), jnp.float32)
    v = jax.random.normal(kv, (N, T, d_m), jnp.float32)

    wq, bq = _init_linear(kwq, d_m, d_k * heads)
    wk, bk = _init_linear(kwk, d_m, d_k * heads)
    wv, bv = _init_linear(kwv, d_m, d_k * heads)
    wo, bo = _init_linear(kwo, d_k * heads, d_m)
    params = (wq, bq, wk, bk, wv, bv, wo, bo)

    # Pad mask: keep everything in batch 0, mask the last 3 keys in batch 1.
    pad_mask = jnp.ones((N, T), jnp.float32).at[1, T - 3:].set(0.0)

    out = multi_head_attention(q, k, v, params, heads=heads, d_k=d_k,
                               causal=causal, pad_mask=pad_mask)
    out = jax.block_until_ready(out)

    ref = _reference(q, k, v, params, heads=heads, d_k=d_k,
                     causal=causal, pad_mask=pad_mask)
    # bf16 operands/output + approx reciprocal -> relaxed tolerance.
    np.testing.assert_allclose(np.asarray(jnp.asarray(out, jnp.float32)),
                               np.asarray(ref), rtol=3e-2, atol=3e-2)
    print("KERNEL_OK")
</pallas_src>

<mosaic_0001>
module attributes {stable_mosaic.version = 11 : i64} {
  func.func @_proj_kernel(%arg0: i32, %arg1: i32, %arg2: memref<1x16x128xbf16, #tpu.memory_space<vmem>>, %arg3: memref<128x128xbf16, #tpu.memory_space<vmem>>, %arg4: memref<1x128xf32, #tpu.memory_space<vmem>>, %arg5: memref<1x4x16x32xbf16, #tpu.memory_space<vmem>>) attributes {dimension_semantics = [#tpu.dimension_semantics<parallel>, #tpu.dimension_semantics<parallel>], iteration_bounds = array<i64: 2, 1>, scalar_prefetch = 0 : i64, scratch_operands = 0 : i64, tpu.core_type = #tpu.core_type<tc>, window_params = [{transform_indices = @transform_0, window_bounds = array<i64: 1, 16, 128>}, {pipeline_mode = #tpu.pipeline_mode<synchronous>, transform_indices = @transform_1, window_bounds = array<i64: 128, 128>}, {pipeline_mode = #tpu.pipeline_mode<synchronous>, transform_indices = @transform_2, window_bounds = array<i64: 1, 128>}, {transform_indices = @transform_3, window_bounds = array<i64: 1, 4, 16, 32>}]} {
    %c0 = arith.constant 0 : index
    %c0_0 = arith.constant 0 : index
    %c0_1 = arith.constant 0 : index
    %0 = vector.load %arg2[%c0, %c0_0, %c0_1] : memref<1x16x128xbf16, #tpu.memory_space<vmem>>, vector<1x16x128xbf16>
    %1 = vector.shape_cast %0 : vector<1x16x128xbf16> to vector<16x128xbf16>
    %c0_2 = arith.constant 0 : index
    %c0_3 = arith.constant 0 : index
    %2 = vector.load %arg3[%c0_2, %c0_3] : memref<128x128xbf16, #tpu.memory_space<vmem>>, vector<128x128xbf16>
    %cst = arith.constant dense<0.000000e+00> : vector<16x128xf32>
    %3 = tpu.matmul %1, %2, %cst {dimension_numbers = #tpu.dot_dimension_numbers<[1], [0], [0], [1], [0, 0, 1, 1], [], []>} : vector<16x128xbf16>, vector<128x128xbf16>, vector<16x128xf32> -> vector<16x128xf32>
    %c0_4 = arith.constant 0 : index
    %c0_5 = arith.constant 0 : index
    %4 = vector.load %arg4[%c0_4, %c0_5] : memref<1x128xf32, #tpu.memory_space<vmem>>, vector<1x128xf32>
    %5 = vector.broadcast %4 : vector<1x128xf32> to vector<16x128xf32>
    %6 = arith.addf %3, %5 : vector<16x128xf32>
    %7 = vector.shape_cast %6 : vector<16x128xf32> to vector<16x4x32xf32>
    %8 = tpu.transpose %7, [1, 0, 2] : vector<16x4x32xf32> -> vector<4x16x32xf32>
    %9 = arith.truncf %8 : vector<4x16x32xf32> to vector<4x16x32xbf16>
    %c0_6 = arith.constant 0 : index
    %c0_7 = arith.constant 0 : index
    %c0_8 = arith.constant 0 : index
    %c0_9 = arith.constant 0 : index
    %10 = vector.load %arg5[%c0_6, %c0_7, %c0_8, %c0_9] : memref<1x4x16x32xbf16, #tpu.memory_space<vmem>>, vector<1x4x16x32xbf16>
    %11 = vector.shape_cast %10 : vector<1x4x16x32xbf16> to vector<4x16x32xbf16>
    %12 = vector.shape_cast %9 : vector<4x16x32xbf16> to vector<1x4x16x32xbf16>
    tpu.vector_store %arg5[%c0_6, %c0_7, %c0_8, %c0_9], %12 {strides = array<i32>} : memref<1x4x16x32xbf16, #tpu.memory_space<vmem>>, vector<1x4x16x32xbf16>,
    return
  }
  func.func @transform_0(%arg0: i32, %arg1: i32) -> (i32, i32, i32) {
    %c0_i32 = arith.constant 0 : i32
    %c0_i32_0 = arith.constant 0 : i32
    return %arg0, %arg1, %c0_i32 : i32, i32, i32
  }
  func.func @transform_1(%arg0: i32, %arg1: i32) -> (i32, i32) {
    %c0_i32 = arith.constant 0 : i32
    %c0_i32_0 = arith.constant 0 : i32
    %c0_i32_1 = arith.constant 0 : i32
    return %c0_i32, %c0_i32_0 : i32, i32
  }
  func.func @transform_2(%arg0: i32, %arg1: i32) -> (i32, i32) {
    %c0_i32 = arith.constant 0 : i32
    %c0_i32_0 = arith.constant 0 : i32
    %c0_i32_1 = arith.constant 0 : i32
    return %c0_i32, %c0_i32_0 : i32, i32
  }
  func.func @transform_3(%arg0: i32, %arg1: i32) -> (i32, i32, i32, i32) {
    %c0_i32 = arith.constant 0 : i32
    %c0_i32_0 = arith.constant 0 : i32
    %c0_i32_1 = arith.constant 0 : i32
    return %arg0, %c0_i32, %arg1, %c0_i32_0 : i32, i32, i32, i32
  }
}

</mosaic_0001>

<llo_original>
// kernel: tpu_custom_call.1
$region0: #{tpu_custom_call.1}
  #allocation0 [shape = 'u32[]', space=smem, size = 0x4, offset = 0x4, fixed_abs, tag = 'smem constant byte address 0x4 - core index']
  #allocation1 [shape = 'u32[72,128]{1,0:T(1,128)}', space=vmem, size = 0x9000, scoped, tag = 'internal scratch']
  %s0 = inlined_call_operand.hbm [shape: bf16[2,16,128], index: 0, kind: input, shape index: {}]
  %s1 = inlined_call_operand.hbm [shape: bf16[128,128], index: 1, kind: input, shape index: {}]
  %s2 = inlined_call_operand.vmem [shape: f32[1,128], index: 2, kind: input, shape index: {}]
  %s3 = inlined_call_operand.hbm [shape: bf16[2,4,16,32], index: 3, kind: output, shape index: {}]
  %s4 = sld [smem:[#allocation0]]
  $region53: #{tpu_custom_call.1} parent=0
    _
  %s6 = ssub.s32 1, %s4
  %s7 = scalar_select 0, %s6, %s4
  $region1: #{tpu_custom_call.1} parent=0
    #allocation2 [shape = 'u8[8192]{0}', space=vmem, size = 0x2000, scoped, tag = 'input window, operand 0']
    #allocation3 [shape = 's32[2]{0}', space=sflag, size = 0x8, scoped, tag = 'scoped memory for tpu_custom_call.1']
    #allocation4 [shape = 's32[2]{0}', space=sflag, size = 0x8, scoped, tag = 'scoped memory for tpu_custom_call.1']
    #allocation5 [shape = 'u8[32768]{0}', space=vmem, size = 0x8000, scoped, tag = 'input window, operand 1, single buffered']
    #allocation6 [shape = 's32[1]{0}', space=sflag, size = 0x4, scoped, tag = 'scoped memory for tpu_custom_call.1']
    #allocation7 [shape = 'u8[32768]{0}', space=vmem, size = 0x8000, scoped, tag = 'output window, operand 0']
    %8 = vsyncpa [#allocation3], 0
    %s9 = scalar_lea.sflag [#allocation3], 1
    %10 = vsyncpa %s9, 0
    %11 = vsyncpa [#allocation6], 0
    %12 = vsyncpa [#allocation4], 0
    %s13 = scalar_lea.sflag [#allocation4], 1
    %14 = vsyncpa %s13, 0
    loop: start=0, step=1, limit=4
    $region2: #{tpu_custom_call.1} parent=1 // loop_pre_header
      _
    $region3: #{tpu_custom_call.1} parent=1 // loop_header
      %s16 = sphi 0, %s20
      %p17 = scmp.ge.s32.totalorder %s16, 4
      %s23 = sphi 0, %s35
      %s24 = sphi 0, %s31
      %s25 = sphi 0, %s23
      %s26 = sphi 0, %s24
      %s27 = sphi 0, %s25
      %s28 = sphi 0, %s26
      %s40 = sphi 0, %s42
      %s43 = sphi 0, %s40
      %s44 = sphi 0, %s43
      %s60 = sphi 0, %s44
      %s64 = sphi 0, %s64
      %s66 = sphi 0, %s64
      %s67 = sphi 0, %s66
      %s81 = sphi 0, %s67
      %s85 = sphi 0, %s85
      %s87 = sphi 0, %s85
      %s88 = sphi 0, %s87
      %s102 = sphi 0, %s88
      %s110 = sphi 0, %s112
      %s113 = sphi 0, %s110
      %s114 = sphi 0, %s113
      %s130 = sphi 0, %s114
    $region4: #{tpu_custom_call.1} parent=1 // loop_header_branch
      %19 = sbr.rel (%p17) target = $region8
    $region5: #{tpu_custom_call.1} parent=1 // loop_body
      %s21 = ssub.s32 %s16, 1
      %s22 = ssub.s32 %s16, 2
      %s29 = sadd.s32 1, %s24
      %p30 = scmp.ge.s32.totalorder %s29, 1
      %s31 = scalar_select %p30, 0, %s29
      %s32 = sadd.s32 1, %s23
      %s33 = scalar_select %p30, %s32, %s23
      %p34 = scmp.ge.s32.totalorder %s33, 2
      %s35 = scalar_select %p34, 0, %s33
      %s36 = ssub.s32 %s23, %s35
      %s37 = ssub.s32 %s24, %s31
      %s38 = sor.u32 %s36, %s37
      %p39 = scmp.eq.s32.totalorder %s38, 0
      %s41 = sadd.s32 %s40, 1
      %s42 = scalar_select %p39, %s40, %s41
      %p45 = pneg %p39
      %p46 = scmp.eq.s32.totalorder %s16, 1
      %p47 = por %p45, %p46
      %p48 = scmp.ne.s32.totalorder %s40, %s43
      %p49 = scmp.eq.s32.totalorder %s16, 0
      %p50 = por %p48, %p49
      %p51 = scmp.ne.s32.totalorder %s40, %s43
      %p52 = scmp.eq.s32.totalorder %s21, 1
      %p53 = por %p51, %p52
      %p54 = scmp.ne.s32.totalorder %s43, %s44
      %p55 = scmp.eq.s32.totalorder %s21, 0
      %p56 = por %p54, %p55
      %p57 = scmp.ne.s32.totalorder %s43, %s44
      %p58 = scmp.eq.s32.totalorder %s22, 1
      %p59 = por %p57, %p58
      %p61 = scmp.ne.s32.totalorder %s44, %s60
      %p62 = scmp.eq.s32.totalorder %s22, 0
      %p63 = por %p61, %p62
      %s65 = sadd.s32 %s64, 1
      %p68 = scmp.eq.s32.totalorder %s16, 1
      %p69 = scmp.ne.s32.totalorder %s64, %s66
      %p70 = scmp.eq.s32.totalorder %s16, 0
      %p71 = por %p69, %p70
      %p72 = scmp.ne.s32.totalorder %s64, %s66
      %p73 = scmp.eq.s32.totalorder %s21, 1
      %p74 = por %p72, %p73
      %p75 = scmp.ne.s32.totalorder %s66, %s67
      %p76 = scmp.eq.s32.totalorder %s21, 0
      %p77 = por %p75, %p76
      %p78 = scmp.ne.s32.totalorder %s66, %s67
      %p79 = scmp.eq.s32.totalorder %s22, 1
      %p80 = por %p78, %p79
      %p82 = scmp.ne.s32.totalorder %s67, %s81
      %p83 = scmp.eq.s32.totalorder %s22, 0
      %p84 = por %p82, %p83
      %s86 = sadd.s32 %s85, 1
      %p89 = scmp.eq.s32.totalorder %s16, 1
      %p90 = scmp.ne.s32.totalorder %s85, %s87
      %p91 = scmp.eq.s32.totalorder %s16, 0
      %p92 = por %p90, %p91
      %p93 = scmp.ne.s32.totalorder %s85, %s87
      %p94 = scmp.eq.s32.totalorder %s21, 1
      %p95 = por %p93, %p94
      %p96 = scmp.ne.s32.totalorder %s87, %s88
      %p97 = scmp.eq.s32.totalorder %s21, 0
      %p98 = por %p96, %p97
      %p99 = scmp.ne.s32.totalorder %s87, %s88
      %p100 = scmp.eq.s32.totalorder %s22, 1
      %p101 = por %p99, %p100
      %p103 = scmp.ne.s32.totalorder %s88, %s102
      %p104 = scmp.eq.s32.totalorder %s22, 0
      %p105 = por %p103, %p104
      %s106 = ssub.s32 %s23, %s35
      %s107 = ssub.s32 %s24, %s31
      %s108 = sor.u32 %s106, %s107
      %p109 = scmp.eq.s32.totalorder %s108, 0
      %s111 = sadd.s32 %s110, 1
      %s112 = scalar_select %p109, %s110, %s111
      %p115 = pneg %p109
      %p116 = scmp.eq.s32.totalorder %s16, 1
      %p117 = por %p115, %p116
      %p118 = scmp.ne.s32.totalorder %s110, %s113
      %p119 = scmp.eq.s32.totalorder %s16, 0
      %p120 = por %p118, %p119
      %p121 = scmp.ne.s32.totalorder %s110, %s113
      %p122 = scmp.eq.s32.totalorder %s21, 1
      %p123 = por %p121, %p122
      %p124 = scmp.ne.s32.totalorder %s113, %s114
      %p125 = scmp.eq.s32.totalorder %s21, 0
      %p126 = por %p124, %p125
      %p127 = scmp.ne.s32.totalorder %s113, %s114
      %p128 = scmp.eq.s32.totalorder %s22, 1
      %p129 = por %p127, %p128
      %p131 = scmp.ne.s32.totalorder %s114, %s130
      %p132 = scmp.eq.s32.totalorder %s22, 0
      %p133 = por %p131, %p132
      %p134 = scmp.le.s32.totalorder 1, %s16
      %p135 = scmp.lt.s32.totalorder %s16, 3
      %p136 = pnand %p134, %p135
      %p137 = pneg %p136
      // Predicated region
      $region9: #{tpu_custom_call.1} parent=5 // pred_check
        _
      $region10: #{tpu_custom_call.1} parent=5 // pred_check_branch
        %139 = sbr.rel (%p136) target = $region12
      $region11: #{tpu_custom_call.1} parent=5 // pred_region
        %s140 = ssub.s32 %s16, 1
        // Predicated region
        $region13: #{tpu_custom_call.1} parent=11 // pred_check
          %p141 = pneg %p77
        $region14: #{tpu_custom_call.1} parent=11 // pred_check_branch
          %143 = sbr.rel (%p141) target = $region16
        $region15: #{tpu_custom_call.1} parent=11 // pred_region
          %145 = vsyncadd [#allocation6], 0
          %s146 = sshll.u32 %s1, 4
          %s147 = int_to_ptr.hbm [resolvable:$true] %s146
          %s148 = sshll.u32 [#allocation5], 4
          %s149 = int_to_ptr.vmem [resolvable:$true] %s148
          %154 = dma.hbm_to_vmem [thread:$0]  %s147, 1024, %s149, [#allocation6], 64, 64, 4
        $region16: #{tpu_custom_call.1} parent=11 // pred_fallthru
          _
        // Predicated region
        $region17: #{tpu_custom_call.1} parent=11 // pred_check
          %p155 = pneg %p98
        $region18: #{tpu_custom_call.1} parent=11 // pred_check_branch
          %157 = sbr.rel (%p155) target = $region20
        $region19: #{tpu_custom_call.1} parent=11 // pred_region
          _
        $region20: #{tpu_custom_call.1} parent=11 // pred_fallthru
          _
      $region12: #{tpu_custom_call.1} parent=5 // pred_fallthru
        _
      %p158 = scmp.lt.s32.totalorder %s16, 2
      // Predicated region
      $region21: #{tpu_custom_call.1} parent=5 // pred_check
        %p159 = pneg %p158
      $region22: #{tpu_custom_call.1} parent=5 // pred_check_branch
        %161 = sbr.rel (%p159) target = $region24
      $region23: #{tpu_custom_call.1} parent=5 // pred_region
        // Predicated region
        $region25: #{tpu_custom_call.1} parent=23 // pred_check
          %p162 = pneg %p50
        $region26: #{tpu_custom_call.1} parent=23 // pred_check_branch
          %164 = sbr.rel (%p162) target = $region28
        $region27: #{tpu_custom_call.1} parent=23 // pred_region
          %s165 = sand.u32 %s40, 1
          %s166 = scalar_lea.sflag [#allocation3], %s165
          %s167 = sand.u32 %s40, 1
          %s168 = smul.addr %s167, 8
          %s169 = scalar_lea.vmem [#allocation2], %s168
          %s170 = smul.u32 2, %s24
          %172 = vsyncadd %s166, 0
          %s173 = smul.addr %s23, 2
          %s174 = sadd.s32 %s170, %s173
          %s175 = smul.addr %s174, 4
          %s176 = scalar_lea.hbm %s0, %s175
          %s177 = sshll.u32 %s176, 4
          %s178 = int_to_ptr.hbm [resolvable:$true] %s177
          %s179 = sshll.u32 %s169, 4
          %s180 = int_to_ptr.vmem [resolvable:$true] %s179
          %185 = dma.hbm_to_vmem [thread:$0]  %s178, 128, %s180, %s166, 64, 64, 4
        $region28: #{tpu_custom_call.1} parent=23 // pred_fallthru
          _
      $region24: #{tpu_custom_call.1} parent=5 // pred_fallthru
        _
      %p186 = scmp.le.s32.totalorder 1, %s16
      %p187 = scmp.lt.s32.totalorder %s16, 3
      %p188 = pnand %p186, %p187
      %p189 = pneg %p188
      // Predicated region
      $region29: #{tpu_custom_call.1} parent=5 // pred_check
        _
      $region30: #{tpu_custom_call.1} parent=5 // pred_check_branch
        %191 = sbr.rel (%p188) target = $region32
      $region31: #{tpu_custom_call.1} parent=5 // pred_region
        %s192 = ssub.s32 %s16, 1
        %s193 = sand.u32 %s43, 1
        %s194 = scalar_lea.sflag [#allocation3], %s193
        %s195 = sand.u32 %s43, 1
        %s196 = smul.addr %s195, 8
        %s197 = scalar_lea.vmem [#allocation2], %s196
        // Predicated region
        $region33: #{tpu_custom_call.1} parent=31 // pred_check
          %p198 = pneg %p56
        $region34: #{tpu_custom_call.1} parent=31 // pred_check_branch
          %200 = sbr.rel (%p198) target = $region36
        $region35: #{tpu_custom_call.1} parent=31 // pred_region
          %202 = dma.done %s194, 128
        $region36: #{tpu_custom_call.1} parent=31 // pred_fallthru
          _
        // Predicated region
        $region37: #{tpu_custom_call.1} parent=31 // pred_check
          %p203 = pneg %p77
        $region38: #{tpu_custom_call.1} parent=31 // pred_check_branch
          %205 = sbr.rel (%p203) target = $region40
        $region39: #{tpu_custom_call.1} parent=31 // pred_region
          %207 = dma.done [#allocation6], 1024
        $region40: #{tpu_custom_call.1} parent=31 // pred_fallthru
          _
        %s208 = sand.u32 %s43, 1
        %s209 = scalar_lea.sflag [#allocation3], %s208
        %s210 = sand.u32 %s43, 1
        %s211 = smul.addr %s210, 8
        %s212 = scalar_lea.vmem [#allocation2], %s211
        %p213 = pneg %p56
        %p214 = pneg %p53
        %p215 = pneg %p77
        %p216 = pneg %p74
        %p217 = pneg %p98
        %p218 = pneg %p95
        %p219 = pneg %p126
        %p220 = pneg %p123
        %s221 = sand.u32 %s113, 1
        %s222 = scalar_lea.sflag [#allocation4], %s221
        %s223 = sand.u32 %s113, 1
        %s224 = smul.addr %s223, 32
        %s225 = scalar_lea.vmem [#allocation7], %s224
        %s226 = smul.u32 2, %s26
        %s227 = smul.u32 2, %s26
        %v228 = vld [vmem:[%s197] sm:$0xf]
        %v229 = vld [vmem:[%s197 + $0x4] sm:$0xf]
        %v230 = vld [vmem:[#allocation5] sm:$0xf]
        %v231 = vld [vmem:[#allocation5 + $0x4] sm:$0xf]
        %v232 = vld [vmem:[#allocation5 + $0x8] sm:$0xf]
        %v233 = vld [vmem:[#allocation5 + $0xc] sm:$0xf]
        %v234 = vld [vmem:[#allocation5 + $0x10] sm:$0xf]
        %v235 = vld [vmem:[#allocation5 + $0x14] sm:$0xf]
        %v236 = vld [vmem:[#allocation5 + $0x18] sm:$0xf]
        %v237 = vld [vmem:[#allocation5 + $0x1c] sm:$0xf]
        %v238 = vld [vmem:[#allocation5 + $0x20] sm:$0xf]
        %v239 = vld [vmem:[#allocation5 + $0x24] sm:$0xf]
        %v240 = vld [vmem:[#allocation5 + $0x28] sm:$0xf]
        %v241 = vld [vmem:[#allocation5 + $0x2c] sm:$0xf]
        %v242 = vld [vmem:[#allocation5 + $0x30] sm:$0xf]
        %v243 = vld [vmem:[#allocation5 + $0x34] sm:$0xf]
        %v244 = vld [vmem:[#allocation5 + $0x38] sm:$0xf]
        %v245 = vld [vmem:[#allocation5 + $0x3c] sm:$0xf]
        %v246 = vld [vmem:[%s2] sm:$0x1]
        %v248 = vperm.slane %v246, 0
        %v252 = vunpack.c.l.b16 %v228
        %v253 = vunpack.c.l.b16 %v229
        %v254 = vpack.c.b16 %v253, %v252
        %v272 = vunpack.c.l.b16 %v230
        %v273 = vunpack.c.l.b16 %v231
        %v274 = vunpack.c.l.b16 %v232
        %v275 = vunpack.c.l.b16 %v233
        %v276 = vunpack.c.l.b16 %v234
        %v277 = vunpack.c.l.b16 %v235
        %v278 = vunpack.c.l.b16 %v236
        %v279 = vunpack.c.l.b16 %v237
        %v280 = vunpack.c.l.b16 %v238
        %v281 = vunpack.c.l.b16 %v239
        %v282 = vunpack.c.l.b16 %v240
        %v283 = vunpack.c.l.b16 %v241
        %v284 = vunpack.c.l.b16 %v242
        %v285 = vunpack.c.l.b16 %v243
        %v286 = vunpack.c.l.b16 %v244
        %v287 = vunpack.c.l.b16 %v245
        %v288 = vpack.c.b16 %v273, %v272
        %v289 = vpack.c.b16 %v275, %v274
        %v290 = vpack.c.b16 %v277, %v276
        %v291 = vpack.c.b16 %v279, %v278
        %v292 = vpack.c.b16 %v281, %v280
        %v293 = vpack.c.b16 %v283, %v282
        %v294 = vpack.c.b16 %v285, %v284
        %v295 = vpack.c.b16 %v287, %v286
        %304 = vmatpush.bf16.msra.mxu0 %v295
        %305 = vmatpush.bf16.msra.mxu0 %v294
        %306 = vmatpush.bf16.msra.mxu0 %v293
        %307 = vmatpush.bf16.msra.mxu0 %v292
        %308 = vmatpush.bf16.msra.mxu0 %v291
        %309 = vmatpush.bf16.msra.mxu0 %v290
        %310 = vmatpush.bf16.msra.mxu0 %v289
        %311 = vmatpush.bf16.msra.mxu0 %v288
        %312 = vmatmul.bf16.gmra.mxu0 %v254
        %v313 = vpop.f32.mrf.mxu0
        %v314 = vadd.f32 %v248, %v313
        %v315 = vpop.f32.mrf.mxu0
        %v316 = vadd.f32 %v248, %v315
        %317 = vdwg.mxu0
        %320 = vrot.lane.b32.xlu0 %v314, 96
        %v321 = vpop.permute.xlu0 %320
        %322 = vrot.lane.b32.xlu0 %v316, 96
        %v323 = vpop.permute.xlu0 %322
        %326 = vrot.lane.b32.xlu0 %v314, 64
        %v327 = vpop.permute.xlu0 %326
        %328 = vrot.lane.b32.xlu0 %v316, 64
        %v329 = vpop.permute.xlu0 %328
        %332 = vrot.lane.b32.xlu0 %v314, 32
        %v333 = vpop.permute.xlu0 %332
        %334 = vrot.lane.b32.xlu0 %v316, 32
        %v335 = vpop.permute.xlu0 %334
        %v338 = vrot.slane %v327, 4
        %vm339 = vcmask 1047556
        %v340 = vsel %vm339, %v338, %v314
        %v341 = vrot.slane %v314, 4
        %v342 = vsel %vm339, %v327, %v341
        %v344 = vunpack.c.l.s4 1983009808
        %v345 = vunpack.c.0.s8 %v344
        %v346 = vperm.slane %v340, %v345
        %v348 = vunpack.c.l.s4 1983009808
        %v349 = vunpack.c.0.s8 %v348
        %v350 = vperm.slane %v342, %v349
        %v351 = vrot.slane %v333, 4
        %v352 = vsel %vm339, %v351, %v321
        %v353 = vrot.slane %v321, 4
        %v354 = vsel %vm339, %v333, %v353
        %v356 = vunpack.c.l.s4 1983009808
        %v357 = vunpack.c.0.s8 %v356
        %v358 = vperm.slane %v352, %v357
        %v360 = vunpack.c.l.s4 1983009808
        %v361 = vunpack.c.0.s8 %v360
        %v362 = vperm.slane %v354, %v361
        %v363 = vrot.slane %v358, 4
        %v364 = vsel %vm339, %v363, %v346
        %v365 = vrot.slane %v346, 4
        %v366 = vsel %vm339, %v358, %v365
        %v368 = vunpack.c.l.s4 1934713408
        %v369 = vunpack.c.0.s8 %v368
        %v370 = vperm.slane %v364, %v369
        %v372 = vunpack.c.l.s4 1934713408
        %v373 = vunpack.c.0.s8 %v372
        %v374 = vperm.slane %v366, %v373
        %v375 = vrot.slane %v362, 4
        %v376 = vsel %vm339, %v375, %v350
        %v377 = vrot.slane %v350, 4
        %v378 = vsel %vm339, %v362, %v377
        %v380 = vunpack.c.l.s4 1934713408
        %v381 = vunpack.c.0.s8 %v380
        %v382 = vperm.slane %v376, %v381
        %v384 = vunpack.c.l.s4 1934713408
        %v385 = vunpack.c.0.s8 %v384
        %v386 = vperm.slane %v378, %v385
        %v387 = vrot.slane %v370, 4
        %v388 = vsel %vm339, 0.0, %v387
        %v389 = vrot.slane %v374, 4
        %v390 = vsel %vm339, 0.0, %v389
        %v391 = vrot.slane %v382, 4
        %v392 = vsel %vm339, 0.0, %v391
        %v393 = vrot.slane %v386, 4
        %v394 = vsel %vm339, 0.0, %v393
        %v395 = vrot.slane %v329, 4
        %v396 = vsel %vm339, %v395, %v316
        %v397 = vrot.slane %v316, 4
        %v398 = vsel %vm339, %v329, %v397
        %v400 = vunpack.c.l.s4 1983009808
        %v401 = vunpack.c.0.s8 %v400
        %v402 = vperm.slane %v396, %v401
        %v404 = vunpack.c.l.s4 1983009808
        %v405 = vunpack.c.0.s8 %v404
        %v406 = vperm.slane %v398, %v405
        %v407 = vrot.slane %v335, 4
        %v408 = vsel %vm339, %v407, %v323
        %v409 = vrot.slane %v323, 4
        %v410 = vsel %vm339, %v335, %v409
        %v412 = vunpack.c.l.s4 1983009808
        %v413 = vunpack.c.0.s8 %v412
        %v414 = vperm.slane %v408, %v413
        %v416 = vunpack.c.l.s4 1983009808
        %v417 = vunpack.c.0.s8 %v416
        %v418 = vperm.slane %v410, %v417
        %v419 = vrot.slane %v414, 4
        %v420 = vsel %vm339, %v419, %v402
        %v421 = vrot.slane %v402, 4
        %v422 = vsel %vm339, %v414, %v421
        %v424 = vunpack.c.l.s4 1934713408
        %v425 = vunpack.c.0.s8 %v424
        %v426 = vperm.slane %v420, %v425
        %v428 = vunpack.c.l.s4 1934713408
        %v429 = vunpack.c.0.s8 %v428
        %v430 = vperm.slane %v422, %v429
        %v431 = vrot.slane %v418, 4
        %v432 = vsel %vm339, %v431, %v406
        %v433 = vrot.slane %v406, 4
        %v434 = vsel %vm339, %v418, %v433
        %v436 = vunpack.c.l.s4 1934713408
        %v437 = vunpack.c.0.s8 %v436
        %v438 = vperm.slane %v432, %v437
        %v440 = vunpack.c.l.s4 1934713408
        %v441 = vunpack.c.0.s8 %v440
        %v442 = vperm.slane %v434, %v441
        %v443 = vrot.slane %v426, 4
        %v444 = vsel %vm339, 0.0, %v443
        %v445 = vrot.slane %v430, 4
        %v446 = vsel %vm339, 0.0, %v445
        %v447 = vrot.slane %v438, 4
        %v448 = vsel %vm339, 0.0, %v447
        %v449 = vrot.slane %v442, 4
        %v450 = vsel %vm339, 0.0, %v449
        %v451 = vsel %vm339, %v389, %v370
        %v453 = vunpack.c.l.s4 1983009808
        %v454 = vunpack.c.0.s8 %v453
        %v455 = vperm.slane %v451, %v454
        %v456 = vrot.slane %v390, 4
        %v457 = vsel %vm339, %v456, %v388
        %v459 = vunpack.c.l.s4 1983009808
        %v460 = vunpack.c.0.s8 %v459
        %v461 = vperm.slane %v457, %v460
        %v462 = vsel %vm339, %v393, %v382
        %v464 = vunpack.c.l.s4 1983009808
        %v465 = vunpack.c.0.s8 %v464
        %v466 = vperm.slane %v462, %v465
        %v467 = vrot.slane %v394, 4
        %v468 = vsel %vm339, %v467, %v392
        %v470 = vunpack.c.l.s4 1983009808
        %v471 = vunpack.c.0.s8 %v470
        %v472 = vperm.slane %v468, %v471
        %v473 = vrot.slane %v461, 4
        %v474 = vsel %vm339, %v473, %v455
        %v475 = vrot.slane %v455, 4
        %v476 = vsel %vm339, %v461, %v475
        %v478 = vunpack.c.l.s4 1934713408
        %v479 = vunpack.c.0.s8 %v478
        %v480 = vperm.slane %v474, %v479
        %v482 = vunpack.c.l.s4 1934713408
        %v483 = vunpack.c.0.s8 %v482
        %v484 = vperm.slane %v476, %v483
        %v485 = vrot.slane %v472, 4
        %v486 = vsel %vm339, %v485, %v466
        %v487 = vrot.slane %v466, 4
        %v488 = vsel %vm339, %v472, %v487
        %v490 = vunpack.c.l.s4 1934713408
        %v491 = vunpack.c.0.s8 %v490
        %v492 = vperm.slane %v486, %v491
        %v494 = vunpack.c.l.s4 1934713408
        %v495 = vunpack.c.0.s8 %v494
        %v496 = vperm.slane %v488, %v495
        %v497 = vrot.slane %v492, 4
        %v498 = vsel %vm339, %v497, %v480
        %v499 = vrot.slane %v480, 4
        %v500 = vsel %vm339, %v492, %v499
        %v501 = vrot.slane %v496, 4
        %v502 = vsel %vm339, %v501, %v484
        %v503 = vrot.slane %v484, 4
        %v504 = vsel %vm339, %v496, %v503
        %v505 = vsel %vm339, %v445, %v426
        %v507 = vunpack.c.l.s4 1983009808
        %v508 = vunpack.c.0.s8 %v507
        %v509 = vperm.slane %v505, %v508
        %v510 = vrot.slane %v446, 4
        %v511 = vsel %vm339, %v510, %v444
        %v513 = vunpack.c.l.s4 1983009808
        %v514 = vunpack.c.0.s8 %v513
        %v515 = vperm.slane %v511, %v514
        %v516 = vsel %vm339, %v449, %v438
        %v518 = vunpack.c.l.s4 1983009808
        %v519 = vunpack.c.0.s8 %v518
        %v520 = vperm.slane %v516, %v519
        %v521 = vrot.slane %v450, 4
        %v522 = vsel %vm339, %v521, %v448
        %v524 = vunpack.c.l.s4 1983009808
        %v525 = vunpack.c.0.s8 %v524
        %v526 = vperm.slane %v522, %v525
        %v527 = vrot.slane %v515, 4
        %v528 = vsel %vm339, %v527, %v509
        %v529 = vrot.slane %v509, 4
        %v530 = vsel %vm339, %v515, %v529
        %v532 = vunpack.c.l.s4 1934713408
        %v533 = vunpack.c.0.s8 %v532
        %v534 = vperm.slane %v528, %v533
        %v536 = vunpack.c.l.s4 1934713408
        %v537 = vunpack.c.0.s8 %v536
        %v538 = vperm.slane %v530, %v537
        %v539 = vrot.slane %v526, 4
        %v540 = vsel %vm339, %v539, %v520
        %v541 = vrot.slane %v520, 4
        %v542 = vsel %vm339, %v526, %v541
        %v544 = vunpack.c.l.s4 1934713408
        %v545 = vunpack.c.0.s8 %v544
        %v546 = vperm.slane %v540, %v545
        %v548 = vunpack.c.l.s4 1934713408
        %v549 = vunpack.c.0.s8 %v548
        %v550 = vperm.slane %v542, %v549
        %v551 = vrot.slane %v546, 4
        %v552 = vsel %vm339, %v551, %v534
        %v553 = vrot.slane %v534, 4
        %v554 = vsel %vm339, %v546, %v553
        %v555 = vrot.slane %v550, 4
        %v556 = vsel %vm339, %v555, %v538
        %v557 = vrot.slane %v538, 4
        %v558 = vsel %vm339, %v550, %v557
        %v559 = vpack.c.bf16 %v498, %v498
        %v560 = vpack.c.bf16 %v552, %v552
        %v561 = vpack.c.bf16 %v500, %v500
        %v562 = vpack.c.bf16 %v554, %v554
        %v563 = vpack.c.bf16 %v502, %v502
        %v564 = vpack.c.bf16 %v556, %v556
        %v565 = vpack.c.bf16 %v504, %v504
        %v566 = vpack.c.bf16 %v558, %v558
        %vm567 = vcmask 257024
        %568 = vst.msk [vmem:[%s225] sm:$0xf] %vm567, %v559
        %569 = vst.msk [vmem:[%s225 + $0x4] sm:$0xf] %vm567, %v560
        %570 = vst.msk [vmem:[%s225 + $0x8] sm:$0xf] %vm567, %v561
        %571 = vst.msk [vmem:[%s225 + $0xc] sm:$0xf] %vm567, %v562
        %572 = vst.msk [vmem:[%s225 + $0x10] sm:$0xf] %vm567, %v563
        %573 = vst.msk [vmem:[%s225 + $0x14] sm:$0xf] %vm567, %v564
        %574 = vst.msk [vmem:[%s225 + $0x18] sm:$0xf] %vm567, %v565
        %575 = vst.msk [vmem:[%s225 + $0x1c] sm:$0xf] %vm567, %v566
        %s576 = sand.u32 %s113, 1
        %s577 = scalar_lea.sflag [#allocation4], %s576
        %s578 = sand.u32 %s113, 1
        %s579 = smul.addr %s578, 32
        %s580 = scalar_lea.vmem [#allocation7], %s579
        // Predicated region
        $region41: #{tpu_custom_call.1} parent=31 // pred_check
          %p581 = pneg %p123
        $region42: #{tpu_custom_call.1} parent=31 // pred_check_branch
          %583 = sbr.rel (%p581) target = $region44
        $region43: #{tpu_custom_call.1} parent=31 // pred_region
          %s584 = smul.u32 2, %s26
          %586 = vsyncadd %s577, 0
          %s587 = smul.addr %s25, 8
          %s588 = sadd.s32 %s584, %s587
          %s589 = smul.addr %s588, 4
          %s590 = scalar_lea.hbm %s3, %s589
          %s591 = sshll.u32 %s580, 4
          %s592 = int_to_ptr.vmem [resolvable:$true] %s591
          %s593 = sshll.u32 %s590, 4
          %s594 = int_to_ptr.hbm [resolvable:$true] %s593
          %599 = dma.vmem_to_hbm [thread:$0]  %s592, 512, %s594, %s577, 64, 64, 4
        $region44: #{tpu_custom_call.1} parent=31 // pred_fallthru
          _
      $region32: #{tpu_custom_call.1} parent=5 // pred_fallthru
        _
      %p600 = scmp.le.s32.totalorder 2, %s16
      // Predicated region
      $region45: #{tpu_custom_call.1} parent=5 // pred_check
        %p601 = pneg %p600
      $region46: #{tpu_custom_call.1} parent=5 // pred_check_branch
        %603 = sbr.rel (%p601) target = $region48
      $region47: #{tpu_custom_call.1} parent=5 // pred_region
        %s604 = ssub.s32 %s16, 2
        // Predicated region
        $region49: #{tpu_custom_call.1} parent=47 // pred_check
          %p605 = pneg %p129
        $region50: #{tpu_custom_call.1} parent=47 // pred_check_branch
          %607 = sbr.rel (%p605) target = $region52
        $region51: #{tpu_custom_call.1} parent=47 // pred_region
          %s608 = sand.u32 %s114, 1
          %s609 = scalar_lea.sflag [#allocation4], %s608
          %s610 = sand.u32 %s114, 1
          %s611 = smul.addr %s610, 32
          %s612 = scalar_lea.vmem [#allocation7], %s611
          %614 = dma.done %s609, 512
        $region52: #{tpu_custom_call.1} parent=47 // pred_fallthru
          _
      $region48: #{tpu_custom_call.1} parent=5 // pred_fallthru
        _
    $region6: #{tpu_custom_call.1} parent=1 // loop_footer
      %s20 = sadd.s32 1, %s16
    $region7: #{tpu_custom_call.1} parent=1 // loop_footer_branch
      %15 = sbr.rel target = $region3
    $region8: #{tpu_custom_call.1} parent=1 // loop_exit
      _
    %615 = vsyncpa [#allocation3], 1
    %s616 = scalar_lea.sflag [#allocation3], 1
    %617 = vsyncpa %s616, 1
    %618 = vsyncpa [#allocation6], 1
    %619 = vsyncpa [#allocation4], 1
    %s620 = scalar_lea.sflag [#allocation4], 1
    %621 = vsyncpa %s620, 1

</llo_original>
